<compile_context>
chip_gen: v7x
topology: tpu7x:2x2x1
jax: 0.10.0
libtpu: 0.0.40
codegen_flags: <defaults>
</compile_context>

<pallas_src>
import functools

import numpy as np
import jax
import jax.numpy as jnp
from jax import lax
from jax.experimental import pallas as pl
from jax.experimental.pallas import tpu as pltpu

landmark_groups = {
    'jaw': list(range(0, 17)),
    'right_eyebrow': list(range(17, 22)),
    'left_eyebrow': list(range(22, 27)),
    'nose': list(range(27, 36)),
    'right_eye': list(range(36, 42)),
    'left_eye': list(range(42, 48)),
    'mouth': list(range(48, 68)),
}


def _coef_segments(groups, weights, batch, num_groups):
    """Static (col_lo, col_hi, value) segments for the folded per-column coefficient.

    coef[col in group g] = w_g / (B * |g| * 2 * num_groups), so that
    sum(|diff| * coef) == (1/num_groups) * sum_g w_g * mean(|diff_g|).
    """
    segs = []
    for region, indices in groups.items():
        idx = sorted(int(i) for i in indices)
        n_elems = batch * len(idx) * 2
        val = float(weights[region]) / (n_elems * num_groups)
        if idx == list(range(idx[0], idx[-1] + 1)):          # contiguous group
            segs.append((2 * idx[0], 2 * (idx[-1] + 1), val))
        else:                                                # general fallback
            for l in idx:
                segs.append((2 * l, 2 * l + 2, val))
    return tuple(segs)


@functools.lru_cache(maxsize=None)
def _coef_vector_np(segments, num_cols):
    coef = np.zeros((1, num_cols), dtype=np.float32)
    for lo, hi, val in segments:
        coef[0, lo:hi] += val
    return coef


@functools.lru_cache(maxsize=None)
def _build_pallas_call(batch, num_cols, tile_rows, segments, squared, dtype_name):
    TB = tile_rows
    num_blocks = -(-batch // TB)
    has_tail = (batch % TB) != 0
    in_dtype = jnp.dtype(dtype_name)

    def kernel(pred_ref, targ_ref, out_ref, acc_ref):
        t = pl.program_id(0)

        @pl.when(t == 0)
        def _init():
            acc_ref[...] = jnp.zeros_like(acc_ref)

        # Upcast AFTER the (possibly bf16) load: DMA stays at native width.
        d = pred_ref[...].astype(jnp.float32) - targ_ref[...].astype(jnp.float32)
        per = d * d if squared else jnp.abs(d)

        if has_tail:
            @pl.when(t == num_blocks - 1)
            def _tail():
                # Only the last block can contain padded / out-of-bounds rows;
                # keep the jnp.where (garbage rows may be inf/NaN).
                rows = t * TB + lax.broadcasted_iota(jnp.int32, (TB, 1), 0)
                contrib = jnp.where(rows < batch, per, 0.0)
                acc_ref[...] += jnp.sum(contrib, axis=0, keepdims=True)

            @pl.when(t != num_blocks - 1)
            def _full():
                acc_ref[...] += jnp.sum(per, axis=0, keepdims=True)
        else:
            acc_ref[...] += jnp.sum(per, axis=0, keepdims=True)

        @pl.when(t == num_blocks - 1)
        def _finish():
            # Baked-in per-column coefficient, built ONCE at the final step
            # (a few static range selects over a lane iota; no extra input DMA).
            col = lax.broadcasted_iota(jnp.int32, (1, num_cols), 1)
            coef = jnp.zeros((1, num_cols), jnp.float32)
            for lo, hi, val in segments:
                coef = coef + jnp.where((col >= lo) & (col < hi),
                                        jnp.float32(val), jnp.float32(0.0))
            out_ref[...] = jnp.sum(acc_ref[...] * coef, keepdims=True)

    in_spec = pl.BlockSpec((TB, num_cols), lambda t: (t, 0))

    return pl.pallas_call(
        kernel,
        out_shape=jax.ShapeDtypeStruct((1, 1), jnp.float32),
        grid=(num_blocks,),
        in_specs=[in_spec, in_spec],
        out_specs=pl.BlockSpec((1, 1), lambda t: (0, 0)),
        scratch_shapes=[pltpu.VMEM((1, num_cols), jnp.float32)],
        compiler_params=pltpu.CompilerParams(
            dimension_semantics=("arbitrary",),
            vmem_limit_bytes=32 * 1024 * 1024,
        ),
        cost_estimate=pl.CostEstimate(
            flops=3 * batch * num_cols,
            transcendentals=0,
            bytes_accessed=2 * batch * num_cols * in_dtype.itemsize + 4,
        ),
    )


def facial_component_loss(pred_landmarks, target_landmarks,
                          groups=None, weights=None, loss_type='l1',
                          use_pallas=None, tile_rows=None):
    """Pallas TPU implementation of FacialComponentLoss.forward.

    pred_landmarks, target_landmarks: (B, 68, 2).
    Returns scalar:
        (1/len(groups)) * sum_g w_g * mean(loss(pred[:, idx_g], target[:, idx_g]))
    with loss = |.| for 'l1', (.)^2 otherwise (MSE).
    """
    groups = landmark_groups if groups is None else groups
    if weights is None:
        weights = {k: 1.0 for k in groups}
    squared = (loss_type != 'l1')

    pred = jnp.asarray(pred_landmarks)
    target = jnp.asarray(target_landmarks)
    B, L, C = pred.shape
    num_cols = L * C
    num_groups = len(groups)
    segments = _coef_segments(groups, weights, B, num_groups)

    # Keep native dtype (bf16 stays bf16) — the kernel upcasts after the load.
    common = jnp.result_type(pred.dtype, target.dtype)
    pred2d = pred.astype(common).reshape(B, num_cols)
    targ2d = target.astype(common).reshape(B, num_cols)

    if use_pallas is None:
        # Workload is tiny / DMA-overhead bound: fused XLA wins until B is in
        # the tens of thousands on every TPU generation.
        use_pallas = B >= 16384

    if not use_pallas:
        coef = jnp.asarray(_coef_vector_np(segments, num_cols))
        d = pred2d.astype(jnp.float32) - targ2d.astype(jnp.float32)
        per = d * d if squared else jnp.abs(d)
        return jnp.sum(per * coef)

    TB = 2048 if tile_rows is None else int(tile_rows)
    TB = min(TB, ((B + 7) // 8) * 8)       # no point in a tile taller than B
    TB = max(8, ((TB + 7) // 8) * 8)       # sublane-aligned

    call = _build_pallas_call(B, num_cols, TB, segments, squared,
                              jnp.dtype(common).name)
    out = call(pred2d, targ2d)             # (1, 1) scalar loss
    return out[0, 0]


def _reference_loss(pred, target, groups=None, weights=None, loss_type='l1'):
    groups = landmark_groups if groups is None else groups
    weights = weights or {k: 1.0 for k in groups}
    pred = jnp.asarray(pred, jnp.float32)
    target = jnp.asarray(target, jnp.float32)
    total = 0.0
    for region, indices in groups.items():
        idx = jnp.asarray(indices)
        d = pred[:, idx] - target[:, idx]
        per = d * d if loss_type != 'l1' else jnp.abs(d)
        total += weights[region] * jnp.mean(per)
    return total / len(groups)


if __name__ == "__main__":
    key = jax.random.PRNGKey(0)
    k1, k2, k3, k4 = jax.random.split(key, 4)

    # Small batch (module-scale shapes). Force the Pallas path so the kernel runs.
    B = 2
    pred = jax.random.normal(k1, (B, 68, 2), dtype=jnp.float32) * 10.0
    target = jax.random.normal(k2, (B, 68, 2), dtype=jnp.float32) * 10.0
    loss_small = jax.block_until_ready(
        facial_component_loss(pred, target, use_pallas=True))
    ref_small = jax.block_until_ready(_reference_loss(pred, target))
    np.testing.assert_allclose(np.asarray(loss_small), np.asarray(ref_small),
                               rtol=1e-5, atol=1e-5)

    # Larger batch with a small tile to exercise the grid: several full blocks
    # plus a partial tail block (300 % 64 != 0) hitting the masked path.
    B2 = 300
    pred2 = jax.random.normal(k3, (B2, 68, 2), dtype=jnp.float32) * 10.0
    target2 = jax.random.normal(k4, (B2, 68, 2), dtype=jnp.float32) * 10.0
    loss_big = jax.block_until_ready(
        facial_component_loss(pred2, target2, use_pallas=True, tile_rows=64))
    ref_big = jax.block_until_ready(_reference_loss(pred2, target2))
    np.testing.assert_allclose(np.asarray(loss_big), np.asarray(ref_big),
                               rtol=1e-5, atol=1e-5)

    # bf16 inputs through the Pallas path (native-dtype DMA, in-kernel upcast).
    loss_bf16 = jax.block_until_ready(
        facial_component_loss(pred2.astype(jnp.bfloat16),
                              target2.astype(jnp.bfloat16),
                              use_pallas=True, tile_rows=64))
    ref_bf16 = jax.block_until_ready(
        _reference_loss(pred2.astype(jnp.bfloat16).astype(jnp.float32),
                        target2.astype(jnp.bfloat16).astype(jnp.float32)))
    np.testing.assert_allclose(np.asarray(loss_bf16), np.asarray(ref_bf16),
                               rtol=3e-2, atol=3e-2)

    # Small-batch fallback path (plain fused JAX) also matches.
    loss_fb = jax.block_until_ready(facial_component_loss(pred, target))
    np.testing.assert_allclose(np.asarray(loss_fb), np.asarray(ref_small),
                               rtol=1e-5, atol=1e-5)

    print("KERNEL_OK")
</pallas_src>

<mosaic_0001>
module attributes {stable_mosaic.version = 11 : i64} {
  func.func @kernel(%arg0: i32, %arg1: memref<8x136xf32, #tpu.memory_space<vmem>>, %arg2: memref<8x136xf32, #tpu.memory_space<vmem>>, %arg3: memref<1x1xf32, #tpu.memory_space<vmem>>, %arg4: memref<1x136xf32, #tpu.memory_space<vmem>>) attributes {dimension_semantics = [#tpu.dimension_semantics<arbitrary>], iteration_bounds = array<i64: 1>, scalar_prefetch = 0 : i64, scratch_operands = 1 : i64, tpu.core_type = #tpu.core_type<tc>, window_params = [{transform_indices = @transform_0, window_bounds = array<i64: 8, 136>}, {transform_indices = @transform_1, window_bounds = array<i64: 8, 136>}, {pipeline_mode = #tpu.pipeline_mode<synchronous>, transform_indices = @transform_2, window_bounds = array<i64: 1, 1>}]} {
    %c0_i32 = arith.constant 0 : i32
    %0 = arith.cmpi eq, %arg0, %c0_i32 : i32
    %1 = arith.extui %0 : i1 to i32
    %c0_i32_0 = arith.constant 0 : i32
    %2 = arith.cmpi ne, %1, %c0_i32_0 : i32
    scf.if %2 {
      %cst = arith.constant 0.000000e+00 : f32
      %16 = vector.broadcast %cst : f32 to vector<1x136xf32>
      %c0_10 = arith.constant 0 : index
      %c0_11 = arith.constant 0 : index
      %17 = vector.load %arg4[%c0_10, %c0_11] : memref<1x136xf32, #tpu.memory_space<vmem>>, vector<1x136xf32>
      tpu.vector_store %arg4[%c0_10, %c0_11], %16 {strides = array<i32>} : memref<1x136xf32, #tpu.memory_space<vmem>>, vector<1x136xf32>,
    } else {
    }
    %c0 = arith.constant 0 : index
    %c0_1 = arith.constant 0 : index
    %3 = vector.load %arg1[%c0, %c0_1] : memref<8x136xf32, #tpu.memory_space<vmem>>, vector<8x136xf32>
    %c0_2 = arith.constant 0 : index
    %c0_3 = arith.constant 0 : index
    %4 = vector.load %arg2[%c0_2, %c0_3] : memref<8x136xf32, #tpu.memory_space<vmem>>, vector<8x136xf32>
    %5 = arith.subf %3, %4 : vector<8x136xf32>
    %6 = math.absf %5 : vector<8x136xf32>
    %c0_i32_4 = arith.constant 0 : i32
    %7 = arith.cmpi eq, %arg0, %c0_i32_4 : i32
    %8 = arith.extui %7 : i1 to i32
    %c0_i32_5 = arith.constant 0 : i32
    %9 = arith.cmpi ne, %8, %c0_i32_5 : i32
    scf.if %9 {
      %c8_i32 = arith.constant 8 : i32
      %16 = arith.muli %arg0, %c8_i32 : i32
      %17 = tpu.iota {dimensions = array<i32: 0>} : vector<8x1xi32>
      %18 = vector.broadcast %16 : i32 to vector<8x1xi32>
      %19 = arith.addi %18, %17 : vector<8x1xi32>
      %c2_i32 = arith.constant 2 : i32
      %20 = vector.broadcast %c2_i32 : i32 to vector<8x1xi32>
      %21 = arith.cmpi slt, %19, %20 : vector<8x1xi32>
      %cst = arith.constant 0.000000e+00 : f32
      %22 = vector.shape_cast %21 : vector<8x1xi1> to vector<8x1xi1>
      %23 = vector.broadcast %22 : vector<8x1xi1> to vector<8x136xi1>
      %24 = vector.broadcast %cst : f32 to vector<8x136xf32>
      %25 = arith.select %23, %6, %24 : vector<8x136xi1>, vector<8x136xf32>
      %c0_10 = arith.constant 0 : index
      %c0_11 = arith.constant 0 : index
      %26 = vector.load %arg4[%c0_10, %c0_11] : memref<1x136xf32, #tpu.memory_space<vmem>>, vector<1x136xf32>
      %cst_12 = arith.constant dense<0.000000e+00> : vector<136xf32>
      %27 = vector.multi_reduction <add>, %25, %cst_12 [0] : vector<8x136xf32> to vector<136xf32>
      %28 = vector.shape_cast %27 : vector<136xf32> to vector<1x136xf32>
      %29 = arith.addf %26, %28 : vector<1x136xf32>
      %c0_13 = arith.constant 0 : index
      %c0_14 = arith.constant 0 : index
      %30 = vector.load %arg4[%c0_13, %c0_14] : memref<1x136xf32, #tpu.memory_space<vmem>>, vector<1x136xf32>
      tpu.vector_store %arg4[%c0_13, %c0_14], %29 {strides = array<i32>} : memref<1x136xf32, #tpu.memory_space<vmem>>, vector<1x136xf32>,
    } else {
    }
    %c0_i32_6 = arith.constant 0 : i32
    %10 = arith.cmpi ne, %arg0, %c0_i32_6 : i32
    %11 = arith.extui %10 : i1 to i32
    %c0_i32_7 = arith.constant 0 : i32
    %12 = arith.cmpi ne, %11, %c0_i32_7 : i32
    scf.if %12 {
      %c0_10 = arith.constant 0 : index
      %c0_11 = arith.constant 0 : index
      %16 = vector.load %arg4[%c0_10, %c0_11] : memref<1x136xf32, #tpu.memory_space<vmem>>, vector<1x136xf32>
      %cst = arith.constant dense<0.000000e+00> : vector<136xf32>
      %17 = vector.multi_reduction <add>, %6, %cst [0] : vector<8x136xf32> to vector<136xf32>
      %18 = vector.shape_cast %17 : vector<136xf32> to vector<1x136xf32>
      %19 = arith.addf %16, %18 : vector<1x136xf32>
      %c0_12 = arith.constant 0 : index
      %c0_13 = arith.constant 0 : index
      %20 = vector.load %arg4[%c0_12, %c0_13] : memref<1x136xf32, #tpu.memory_space<vmem>>, vector<1x136xf32>
      tpu.vector_store %arg4[%c0_12, %c0_13], %19 {strides = array<i32>} : memref<1x136xf32, #tpu.memory_space<vmem>>, vector<1x136xf32>,
    } else {
    }
    %c0_i32_8 = arith.constant 0 : i32
    %13 = arith.cmpi eq, %arg0, %c0_i32_8 : i32
    %14 = arith.extui %13 : i1 to i32
    %c0_i32_9 = arith.constant 0 : i32
    %15 = arith.cmpi ne, %14, %c0_i32_9 : i32
    scf.if %15 {
      %16 = tpu.iota {dimensions = array<i32: 1>} : vector<1x136xi32>
      %cst = arith.constant 0.000000e+00 : f32
      %17 = vector.broadcast %cst : f32 to vector<1x136xf32>
      %c0_i32_10 = arith.constant 0 : i32
      %18 = vector.broadcast %c0_i32_10 : i32 to vector<1x136xi32>
      %19 = arith.cmpi sge, %16, %18 : vector<1x136xi32>
      %c34_i32 = arith.constant 34 : i32
      %20 = vector.broadcast %c34_i32 : i32 to vector<1x136xi32>
      %21 = arith.cmpi slt, %16, %20 : vector<1x136xi32>
      %22 = arith.andi %19, %21 : vector<1x136xi1>
      %cst_11 = arith.constant 0.00210084044 : f32
      %cst_12 = arith.constant 0.000000e+00 : f32
      %23 = vector.broadcast %cst_11 : f32 to vector<1x136xf32>
      %24 = vector.broadcast %cst_12 : f32 to vector<1x136xf32>
      %25 = arith.select %22, %23, %24 : vector<1x136xi1>, vector<1x136xf32>
      %26 = arith.addf %17, %25 : vector<1x136xf32>
      %c34_i32_13 = arith.constant 34 : i32
      %27 = vector.broadcast %c34_i32_13 : i32 to vector<1x136xi32>
      %28 = arith.cmpi sge, %16, %27 : vector<1x136xi32>
      %c44_i32 = arith.constant 44 : i32
      %29 = vector.broadcast %c44_i32 : i32 to vector<1x136xi32>
      %30 = arith.cmpi slt, %16, %29 : vector<1x136xi32>
      %31 = arith.andi %28, %30 : vector<1x136xi1>
      %cst_14 = arith.constant 0.00714285718 : f32
      %cst_15 = arith.constant 0.000000e+00 : f32
      %32 = vector.broadcast %cst_14 : f32 to vector<1x136xf32>
      %33 = vector.broadcast %cst_15 : f32 to vector<1x136xf32>
      %34 = arith.select %31, %32, %33 : vector<1x136xi1>, vector<1x136xf32>
      %35 = arith.addf %26, %34 : vector<1x136xf32>
      %c44_i32_16 = arith.constant 44 : i32
      %36 = vector.broadcast %c44_i32_16 : i32 to vector<1x136xi32>
      %37 = arith.cmpi sge, %16, %36 : vector<1x136xi32>
      %c54_i32 = arith.constant 54 : i32
      %38 = vector.broadcast %c54_i32 : i32 to vector<1x136xi32>
      %39 = arith.cmpi slt, %16, %38 : vector<1x136xi32>
      %40 = arith.andi %37, %39 : vector<1x136xi1>
      %cst_17 = arith.constant 0.00714285718 : f32
      %cst_18 = arith.constant 0.000000e+00 : f32
      %41 = vector.broadcast %cst_17 : f32 to vector<1x136xf32>
      %42 = vector.broadcast %cst_18 : f32 to vector<1x136xf32>
      %43 = arith.select %40, %41, %42 : vector<1x136xi1>, vector<1x136xf32>
      %44 = arith.addf %35, %43 : vector<1x136xf32>
      %c54_i32_19 = arith.constant 54 : i32
      %45 = vector.broadcast %c54_i32_19 : i32 to vector<1x136xi32>
      %46 = arith.cmpi sge, %16, %45 : vector<1x136xi32>
      %c72_i32 = arith.constant 72 : i32
      %47 = vector.broadcast %c72_i32 : i32 to vector<1x136xi32>
      %48 = arith.cmpi slt, %16, %47 : vector<1x136xi32>
      %49 = arith.andi %46, %48 : vector<1x136xi1>
      %cst_20 = arith.constant 0.0039682542 : f32
      %cst_21 = arith.constant 0.000000e+00 : f32
      %50 = vector.broadcast %cst_20 : f32 to vector<1x136xf32>
      %51 = vector.broadcast %cst_21 : f32 to vector<1x136xf32>
      %52 = arith.select %49, %50, %51 : vector<1x136xi1>, vector<1x136xf32>
      %53 = arith.addf %44, %52 : vector<1x136xf32>
      %c72_i32_22 = arith.constant 72 : i32
      %54 = vector.broadcast %c72_i32_22 : i32 to vector<1x136xi32>
      %55 = arith.cmpi sge, %16, %54 : vector<1x136xi32>
      %c84_i32 = arith.constant 84 : i32
      %56 = vector.broadcast %c84_i32 : i32 to vector<1x136xi32>
      %57 = arith.cmpi slt, %16, %56 : vector<1x136xi32>
      %58 = arith.andi %55, %57 : vector<1x136xi1>
      %cst_23 = arith.constant 0.00595238106 : f32
      %cst_24 = arith.constant 0.000000e+00 : f32
      %59 = vector.broadcast %cst_23 : f32 to vector<1x136xf32>
      %60 = vector.broadcast %cst_24 : f32 to vector<1x136xf32>
      %61 = arith.select %58, %59, %60 : vector<1x136xi1>, vector<1x136xf32>
      %62 = arith.addf %53, %61 : vector<1x136xf32>
      %c84_i32_25 = arith.constant 84 : i32
      %63 = vector.broadcast %c84_i32_25 : i32 to vector<1x136xi32>
      %64 = arith.cmpi sge, %16, %63 : vector<1x136xi32>
      %c96_i32 = arith.constant 96 : i32
      %65 = vector.broadcast %c96_i32 : i32 to vector<1x136xi32>
      %66 = arith.cmpi slt, %16, %65 : vector<1x136xi32>
      %67 = arith.andi %64, %66 : vector<1x136xi1>
      %cst_26 = arith.constant 0.00595238106 : f32
      %cst_27 = arith.constant 0.000000e+00 : f32
      %68 = vector.broadcast %cst_26 : f32 to vector<1x136xf32>
      %69 = vector.broadcast %cst_27 : f32 to vector<1x136xf32>
      %70 = arith.select %67, %68, %69 : vector<1x136xi1>, vector<1x136xf32>
      %71 = arith.addf %62, %70 : vector<1x136xf32>
      %c96_i32_28 = arith.constant 96 : i32
      %72 = vector.broadcast %c96_i32_28 : i32 to vector<1x136xi32>
      %73 = arith.cmpi sge, %16, %72 : vector<1x136xi32>
      %c136_i32 = arith.constant 136 : i32
      %74 = vector.broadcast %c136_i32 : i32 to vector<1x136xi32>
      %75 = arith.cmpi slt, %16, %74 : vector<1x136xi32>
      %76 = arith.andi %73, %75 : vector<1x136xi1>
      %cst_29 = arith.constant 0.0017857143 : f32
      %cst_30 = arith.constant 0.000000e+00 : f32
      %77 = vector.broadcast %cst_29 : f32 to vector<1x136xf32>
      %78 = vector.broadcast %cst_30 : f32 to vector<1x136xf32>
      %79 = arith.select %76, %77, %78 : vector<1x136xi1>, vector<1x136xf32>
      %80 = arith.addf %71, %79 : vector<1x136xf32>
      %c0_31 = arith.constant 0 : index
      %c0_32 = arith.constant 0 : index
      %81 = vector.load %arg4[%c0_31, %c0_32] : memref<1x136xf32, #tpu.memory_space<vmem>>, vector<1x136xf32>
      %82 = arith.mulf %81, %80 : vector<1x136xf32>
      %83 = vector.shape_cast %82 : vector<1x136xf32> to vector<1x1x136xf32>
      %cst_33 = arith.constant dense<0.000000e+00> : vector<1xf32>
      %84 = vector.multi_reduction <add>, %83, %cst_33 [1, 2] : vector<1x1x136xf32> to vector<1xf32>
      %85 = vector.shape_cast %84 : vector<1xf32> to vector<1x1x1xf32>
      %86 = vector.extract %85[0, 0, 0] : f32 from vector<1x1x1xf32>
      %87 = vector.broadcast %86 : f32 to vector<1x1xf32>
      %c0_34 = arith.constant 0 : index
      %c0_35 = arith.constant 0 : index
      %88 = vector.load %arg3[%c0_34, %c0_35] : memref<1x1xf32, #tpu.memory_space<vmem>>, vector<1x1xf32>
      tpu.vector_store %arg3[%c0_34, %c0_35], %87 {strides = array<i32>} : memref<1x1xf32, #tpu.memory_space<vmem>>, vector<1x1xf32>,
    } else {
    }
    return
  }
  func.func @transform_0(%arg0: i32) -> (i32, i32) {
    %c0_i32 = arith.constant 0 : i32
    %c0_i32_0 = arith.constant 0 : i32
    return %arg0, %c0_i32 : i32, i32
  }
  func.func @transform_1(%arg0: i32) -> (i32, i32) {
    %c0_i32 = arith.constant 0 : i32
    %c0_i32_0 = arith.constant 0 : i32
    return %arg0, %c0_i32 : i32, i32
  }
  func.func @transform_2(%arg0: i32) -> (i32, i32) {
    %c0_i32 = arith.constant 0 : i32
    %c0_i32_0 = arith.constant 0 : i32
    %c0_i32_1 = arith.constant 0 : i32
    return %c0_i32, %c0_i32_0 : i32, i32
  }
}

</mosaic_0001>

<llo_original>
// kernel: tpu_custom_call.1
$region0: #{tpu_custom_call.1}
  #allocation0 [shape = 'u32[]', space=smem, size = 0x4, offset = 0x4, fixed_abs, tag = 'smem constant byte address 0x4 - core index']
  #allocation1 [shape = 'u32[144,128]{1,0:T(1,128)}', space=vmem, size = 0x12000, scoped, tag = 'internal scratch']
  #allocation2 [shape = 'f32[1,136]{1,0:T(1,128)}', space=vmem, size = 0x400, scoped, tag = 'scratch operand']
  %s0 = inlined_call_operand.hbm [shape: f32[2,136], index: 0, kind: input, shape index: {}]
  %s1 = inlined_call_operand.hbm [shape: f32[2,136], index: 1, kind: input, shape index: {}]
  %s2 = inlined_call_operand.hbm [shape: f32[1,1], index: 2, kind: output, shape index: {}]
  %s3 = sld [smem:[#allocation0]]
  $region42: #{tpu_custom_call.1} parent=0
    _
  %s5 = ssub.s32 1, %s3
  %s6 = scalar_select 0, %s5, %s3
  $region1: #{tpu_custom_call.1} parent=0
    #allocation3 [shape = 'u8[8192]{0}', space=vmem, size = 0x2000, scoped, tag = 'input window, operand 0, single buffered']
    #allocation4 [shape = 's32[1]{0}', space=sflag, size = 0x4, scoped, tag = 'scoped memory for tpu_custom_call.1']
    #allocation5 [shape = 's32[1]{0}', space=sflag, size = 0x4, scoped, tag = 'scoped memory for tpu_custom_call.1']
    #allocation6 [shape = 'u8[8192]{0}', space=vmem, size = 0x2000, scoped, tag = 'input window, operand 1, single buffered']
    #allocation7 [shape = 's32[1]{0}', space=sflag, size = 0x4, scoped, tag = 'scoped memory for tpu_custom_call.1']
    #allocation8 [shape = 'u8[512]{0}', space=vmem, size = 0x400, scoped, tag = 'output window, operand 0, single buffered']
    %7 = vsyncpa [#allocation4], 0
    %8 = vsyncpa [#allocation7], 0
    %9 = vsyncpa [#allocation5], 0
    // Predicated region
    $region2: #{tpu_custom_call.1} parent=1 // pred_check
      _
    $region3: #{tpu_custom_call.1} parent=1 // pred_check_branch
      %11 = sbr.rel (0) target = $region5
    $region4: #{tpu_custom_call.1} parent=1 // pred_region
      %s13 = ssub.s32 256, 64
      %14 = vsyncadd [#allocation4], %s13
      %s15 = sshll.u32 [#allocation3], 4
      %s16 = int_to_ptr.vmem [resolvable:$true] %s15
      %21 = dma.hbm_to_vmem [thread:$0]  %s0, 64, %s16, [#allocation4], 64, 64, 4
    $region5: #{tpu_custom_call.1} parent=1 // pred_fallthru
      _
    // Predicated region
    $region6: #{tpu_custom_call.1} parent=1 // pred_check
      _
    $region7: #{tpu_custom_call.1} parent=1 // pred_check_branch
      %23 = sbr.rel (0) target = $region9
    $region8: #{tpu_custom_call.1} parent=1 // pred_region
      %s25 = ssub.s32 256, 64
      %26 = vsyncadd [#allocation7], %s25
      %s27 = sshll.u32 [#allocation6], 4
      %s28 = int_to_ptr.vmem [resolvable:$true] %s27
      %33 = dma.hbm_to_vmem [thread:$0]  %s1, 64, %s28, [#allocation7], 64, 64, 4
    $region9: #{tpu_custom_call.1} parent=1 // pred_fallthru
      _
    // Predicated region
    $region10: #{tpu_custom_call.1} parent=1 // pred_check
      _
    $region11: #{tpu_custom_call.1} parent=1 // pred_check_branch
      %35 = sbr.rel (0) target = $region13
    $region12: #{tpu_custom_call.1} parent=1 // pred_region
      %36 = dma.done [#allocation4], 256
    $region13: #{tpu_custom_call.1} parent=1 // pred_fallthru
      _
    // Predicated region
    $region14: #{tpu_custom_call.1} parent=1 // pred_check
      _
    $region15: #{tpu_custom_call.1} parent=1 // pred_check_branch
      %38 = sbr.rel (0) target = $region17
    $region16: #{tpu_custom_call.1} parent=1 // pred_region
      %39 = dma.done [#allocation7], 256
    $region17: #{tpu_custom_call.1} parent=1 // pred_fallthru
      _
    %p40 = scmp.eq.s32.totalorder 0, 0
    // Predicated region
    $region18: #{tpu_custom_call.1} parent=1 // pred_check
      %p41 = pneg %p40
    $region19: #{tpu_custom_call.1} parent=1 // pred_check_branch
      %43 = sbr.rel (%p41) target = $region21
    $region20: #{tpu_custom_call.1} parent=1 // pred_region
      %v44 = vlaneseq
      %vm45 = vcmp.ge.s32.totalorder %v44, 0
      %vm46 = vcmp.lt.s32.totalorder %v44, 136
      %vm47 = vmand %vm45, %vm46
      %48 = vst.msk [vmem:[#allocation2] sm:$0x3] %vm47, 0.0
    $region21: #{tpu_custom_call.1} parent=1 // pred_fallthru
      _
    %v49 = vld [vmem:[#allocation3] sm:$0xf]
    %v50 = vld [vmem:[#allocation3 + $0x4] sm:$0xf]
    %v51 = vld [vmem:[#allocation3 + $0x8] sm:$0xf]
    %v52 = vld [vmem:[#allocation3 + $0xc] sm:$0xf]
    %v53 = vld [vmem:[#allocation6] sm:$0xf]
    %v54 = vld [vmem:[#allocation6 + $0x4] sm:$0xf]
    %v55 = vld [vmem:[#allocation6 + $0x8] sm:$0xf]
    %v56 = vld [vmem:[#allocation6 + $0xc] sm:$0xf]
    %v57 = vsub.f32 %v49, %v53
    %v58 = vsub.f32 %v50, %v54
    %v59 = vsub.f32 %v51, %v55
    %v60 = vsub.f32 %v52, %v56
    %v61 = vand.u32 2147483647, %v57
    %v62 = vand.u32 2147483647, %v58
    %v63 = vand.u32 2147483647, %v59
    %v64 = vand.u32 2147483647, %v60
    // Predicated region
    $region22: #{tpu_custom_call.1} parent=1 // pred_check
      %p65 = pneg %p40
    $region23: #{tpu_custom_call.1} parent=1 // pred_check_branch
      %67 = sbr.rel (%p65) target = $region25
    $region24: #{tpu_custom_call.1} parent=1 // pred_region
      %s68 = smul.u32 0, 8
      %v69 = vlaneseq
      %v70 = vshrl.u32 %v69, 7
      %v71 = vstv %s68
      %v72 = vadd.s32 %v71, %v70
      %vm73 = vcmp.lt.s32.totalorder %v72, 2
      %v74 = vsel %vm73, 1, 0
      %vm75 = vcmp.eq.s32.totalorder %v74, 1
      %v80 = vcombine.low %v61, %v62
      %v81 = vcombine.low %v63, %v64
      %v83 = vunpack.c.l.s4 1983009808
      %v84 = vunpack.c.0.s8 %v83
      %v85 = vlaneseq
      %v86 = vshrl.u32 %v85, 7
      %v87 = vsub.s32 %v84, %v86
      %v88 = vrot.slane %v80, %v87
      %v90 = vunpack.c.l.s4 1983009808
      %v91 = vunpack.c.0.s8 %v90
      %v92 = vlaneseq
      %v93 = vshrl.u32 %v92, 7
      %v94 = vsub.s32 %v91, %v93
      %v95 = vrot.slane %v81, %v94
      %v96 = vcombine.low %v88, %v95
      %v97 = vcombine.high %v88, %v95
      %v100 = vsel %vm75, %v96, 0.0
      %v101 = vsel %vm75, %v97, 0.0
      %v102 = vld [vmem:[#allocation2] sm:$0x3]
      %v103 = vrot.slane %v100, 4
      %v104 = vadd.f32 %v100, %v103
      %v105 = vrot.slane %v104, 2
      %v106 = vadd.f32 %v104, %v105
      %v107 = vrot.slane %v106, 1
      %v108 = vadd.f32 %v106, %v107
      %vm109 = vcmask 64512
      %v110 = vsel %vm109, %v101, 0.0
      %v111 = vrot.slane %v110, 4
      %v112 = vadd.f32 %v110, %v111
      %v113 = vrot.slane %v112, 2
      %v114 = vadd.f32 %v112, %v113
      %v115 = vrot.slane %v114, 1
      %v116 = vadd.f32 %v114, %v115
      %v119 = vcombine.low %v108, %v116
      %v121 = vunpack.c.l.s4 1966171168
      %v122 = vunpack.c.0.s8 %v121
      %v123 = vlaneseq
      %v124 = vshrl.u32 %v123, 7
      %v125 = vsub.s32 %v122, %v124
      %v126 = vrot.slane %v119, %v125
      %v128 = vunpack.c.l.s4 1966171168
      %v129 = vunpack.c.0.s8 %v128
      %v130 = vlaneseq
      %v131 = vshrl.u32 %v130, 7
      %v132 = vsub.s32 %v129, %v131
      %v133 = vrot.slane %v126, %v132
      %v135 = vadd.f32 %v102, %v133
      %v136 = vlaneseq
      %vm137 = vcmp.ge.s32.totalorder %v136, 0
      %vm138 = vcmp.lt.s32.totalorder %v136, 136
      %vm139 = vmand %vm137, %vm138
      %140 = vst.msk [vmem:[#allocation2] sm:$0x3] %vm139, %v135
    $region25: #{tpu_custom_call.1} parent=1 // pred_fallthru
      _
    %p141 = scmp.ne.s32.totalorder 0, 0
    // Predicated region
    $region26: #{tpu_custom_call.1} parent=1 // pred_check
      %p142 = pneg %p141
    $region27: #{tpu_custom_call.1} parent=1 // pred_check_branch
      %144 = sbr.rel (%p142) target = $region29
    $region28: #{tpu_custom_call.1} parent=1 // pred_region
      %v145 = vld [vmem:[#allocation2] sm:$0x3]
      %v150 = vcombine.low %v61, %v62
      %v151 = vcombine.low %v63, %v64
      %v153 = vunpack.c.l.s4 1983009808
      %v154 = vunpack.c.0.s8 %v153
      %v155 = vlaneseq
      %v156 = vshrl.u32 %v155, 7
      %v157 = vsub.s32 %v154, %v156
      %v158 = vrot.slane %v150, %v157
      %v160 = vunpack.c.l.s4 1983009808
      %v161 = vunpack.c.0.s8 %v160
      %v162 = vlaneseq
      %v163 = vshrl.u32 %v162, 7
      %v164 = vsub.s32 %v161, %v163
      %v165 = vrot.slane %v151, %v164
      %v166 = vcombine.low %v158, %v165
      %v167 = vcombine.high %v158, %v165
      %v170 = vrot.slane %v166, 4
      %v171 = vadd.f32 %v166, %v170
      %v172 = vrot.slane %v171, 2
      %v173 = vadd.f32 %v171, %v172
      %v174 = vrot.slane %v173, 1
      %v175 = vadd.f32 %v173, %v174
      %vm176 = vcmask 64512
      %v177 = vsel %vm176, %v167, 0.0
      %v178 = vrot.slane %v177, 4
      %v179 = vadd.f32 %v177, %v178
      %v180 = vrot.slane %v179, 2
      %v181 = vadd.f32 %v179, %v180
      %v182 = vrot.slane %v181, 1
      %v183 = vadd.f32 %v181, %v182
      %v186 = vcombine.low %v175, %v183
      %v188 = vunpack.c.l.s4 1966171168
      %v189 = vunpack.c.0.s8 %v188
      %v190 = vlaneseq
      %v191 = vshrl.u32 %v190, 7
      %v192 = vsub.s32 %v189, %v191
      %v193 = vrot.slane %v186, %v192
      %v195 = vunpack.c.l.s4 1966171168
      %v196 = vunpack.c.0.s8 %v195
      %v197 = vlaneseq
      %v198 = vshrl.u32 %v197, 7
      %v199 = vsub.s32 %v196, %v198
      %v200 = vrot.slane %v193, %v199
      %v202 = vadd.f32 %v145, %v200
      %v203 = vlaneseq
      %vm204 = vcmp.ge.s32.totalorder %v203, 0
      %vm205 = vcmp.lt.s32.totalorder %v203, 136
      %vm206 = vmand %vm204, %vm205
      %207 = vst.msk [vmem:[#allocation2] sm:$0x3] %vm206, %v202
    $region29: #{tpu_custom_call.1} parent=1 // pred_fallthru
      _
    // Predicated region
    $region30: #{tpu_custom_call.1} parent=1 // pred_check
      %p208 = pneg %p40
    $region31: #{tpu_custom_call.1} parent=1 // pred_check_branch
      %210 = sbr.rel (%p208) target = $region33
    $region32: #{tpu_custom_call.1} parent=1 // pred_region
      %v211 = vlaneseq
      %v212 = vand.u32 %v211, 127
      %v213 = vadd.s32 %v212, 128
      %vm214 = vcmp.ge.s32.totalorder %v212, 0
      %vm215 = vcmp.ge.s32.totalorder %v213, 0
      %vm216 = vcmp.lt.s32.totalorder %v212, 34
      %vm217 = vcmp.lt.s32.totalorder %v213, 34
      %vm218 = vmand %vm214, %vm216
      %vm219 = vmand %vm215, %vm217
      %v220 = vsel %vm218, 0.0021008404, 0.0
      %v221 = vsel %vm219, 0.0021008404, 0.0
      %v222 = vadd.f32 %v220, 0.0
      %v223 = vadd.f32 %v221, 0.0
      %vm224 = vcmp.ge.s32.totalorder %v212, 34
      %vm225 = vcmp.ge.s32.totalorder %v213, 34
      %vm226 = vcmp.lt.s32.totalorder %v212, 44
      %vm227 = vcmp.lt.s32.totalorder %v213, 44
      %vm228 = vmand %vm224, %vm226
      %vm229 = vmand %vm225, %vm227
      %v230 = vsel %vm228, 0.007142857, 0.0
      %v231 = vsel %vm229, 0.007142857, 0.0
      %v232 = vadd.f32 %v222, %v230
      %v233 = vadd.f32 %v223, %v231
      %vm234 = vcmp.ge.s32.totalorder %v212, 44
      %vm235 = vcmp.ge.s32.totalorder %v213, 44
      %vm236 = vcmp.lt.s32.totalorder %v212, 54
      %vm237 = vcmp.lt.s32.totalorder %v213, 54
      %vm238 = vmand %vm234, %vm236
      %vm239 = vmand %vm235, %vm237
      %v240 = vsel %vm238, 0.007142857, 0.0
      %v241 = vsel %vm239, 0.007142857, 0.0
      %v242 = vadd.f32 %v232, %v240
      %v243 = vadd.f32 %v233, %v241
      %vm244 = vcmp.ge.s32.totalorder %v212, 54
      %vm245 = vcmp.ge.s32.totalorder %v213, 54
      %vm246 = vcmp.lt.s32.totalorder %v212, 72
      %vm247 = vcmp.lt.s32.totalorder %v213, 72
      %vm248 = vmand %vm244, %vm246
      %vm249 = vmand %vm245, %vm247
      %v250 = vsel %vm248, 0.003968254, 0.0
      %v251 = vsel %vm249, 0.003968254, 0.0
      %v252 = vadd.f32 %v242, %v250
      %v253 = vadd.f32 %v243, %v251
      %vm254 = vcmp.ge.s32.totalorder %v212, 72
      %vm255 = vcmp.ge.s32.totalorder %v213, 72
      %vm256 = vcmp.lt.s32.totalorder %v212, 84
      %vm257 = vcmp.lt.s32.totalorder %v213, 84
      %vm258 = vmand %vm254, %vm256
      %vm259 = vmand %vm255, %vm257
      %v260 = vsel %vm258, 0.005952381, 0.0
      %v261 = vsel %vm259, 0.005952381, 0.0
      %v262 = vadd.f32 %v252, %v260
      %v263 = vadd.f32 %v253, %v261
      %vm264 = vcmp.ge.s32.totalorder %v212, 84
      %vm265 = vcmp.ge.s32.totalorder %v213, 84
      %vm266 = vcmp.lt.s32.totalorder %v212, 96
      %vm267 = vcmp.lt.s32.totalorder %v213, 96
      %vm268 = vmand %vm264, %vm266
      %vm269 = vmand %vm265, %vm267
      %v270 = vsel %vm268, 0.005952381, 0.0
      %v271 = vsel %vm269, 0.005952381, 0.0
      %v272 = vadd.f32 %v262, %v270
      %v273 = vadd.f32 %v263, %v271
      %vm274 = vcmp.ge.s32.totalorder %v212, 96
      %vm275 = vcmp.ge.s32.totalorder %v213, 96
      %vm276 = vcmp.lt.s32.totalorder %v212, 136
      %vm277 = vcmp.lt.s32.totalorder %v213, 136
      %vm278 = vmand %vm274, %vm276
      %vm279 = vmand %vm275, %vm277
      %v280 = vsel %vm278, 0.0017857143, 0.0
      %v281 = vsel %vm279, 0.0017857143, 0.0
      %v282 = vadd.f32 %v272, %v280
      %v283 = vadd.f32 %v273, %v281
      %v284 = vld [vmem:[#allocation2] sm:$0x3]
      %v287 = vcombine.low %v282, %v283
      %v289 = vunpack.c.l.s4 1966171168
      %v290 = vunpack.c.0.s8 %v289
      %v291 = vlaneseq
      %v292 = vshrl.u32 %v291, 7
      %v293 = vsub.s32 %v290, %v292
      %v294 = vrot.slane %v287, %v293
      %v296 = vunpack.c.l.s4 1966171168
      %v297 = vunpack.c.0.s8 %v296
      %v298 = vlaneseq
      %v299 = vshrl.u32 %v298, 7
      %v300 = vsub.s32 %v297, %v299
      %v301 = vrot.slane %v294, %v300
      %v303 = vmul.f32 %v284, %v301
      %v305 = vlaneseq
      %v306 = vshrl.u32 %v305, 7
      %v307 = vsub.s32 0, %v306
      %v308 = vrot.slane %v303, %v307
      %v309 = vlaneseq
      %v310 = vshrl.u32 %v309, 7
      %v311 = vsub.s32 1, %v310
      %v312 = vrot.slane %v303, %v311
      %vm315 = vcmask 1040384
      %v316 = vsel %vm315, %v308, 0.0
      %vm317 = vcmask 57344
      %v318 = vsel %vm317, %v312, 0.0
      %v319 = vadd.f32 %v316, %v318
      %320 = vadd.xlane.f32.xlu0 %v319
      %v321 = vpop.xlane.xlu0 %320
      %v322 = vrot.slane %v321, 4
      %v323 = vadd.f32 %v321, %v322
      %v324 = vrot.slane %v323, 2
      %v325 = vadd.f32 %v323, %v324
      %v326 = vrot.slane %v325, 1
      %v327 = vadd.f32 %v325, %v326
      %s328 = vtos %v327
      %v329 = vstv %s328
      %vm330 = vcmask 0
      %331 = vst.msk [vmem:[#allocation8] sm:$0x1] %vm330, %v329
    $region33: #{tpu_custom_call.1} parent=1 // pred_fallthru
      _
    // Predicated region
    $region34: #{tpu_custom_call.1} parent=1 // pred_check
      _
    $region35: #{tpu_custom_call.1} parent=1 // pred_check_branch
      %333 = sbr.rel (0) target = $region37
    $region36: #{tpu_custom_call.1} parent=1 // pred_region
      %s335 = ssub.s32 16, 16
      %336 = vsyncadd [#allocation5], %s335
      %s338 = sshll.u32 [#allocation8], 4
      %s339 = int_to_ptr.vmem [resolvable:$true] %s338
      %341 = dma.vmem_to_hbm [thread:$0]  %s339, 16, %s2, [#allocation5]
    $region37: #{tpu_custom_call.1} parent=1 // pred_fallthru
      _
    // Predicated region
    $region38: #{tpu_custom_call.1} parent=1 // pred_check
      _
    $region39: #{tpu_custom_call.1} parent=1 // pred_check_branch
      %343 = sbr.rel (0) target = $region41
    $region40: #{tpu_custom_call.1} parent=1 // pred_region
      %344 = dma.done [#allocation5], 16
    $region41: #{tpu_custom_call.1} parent=1 // pred_fallthru
      _
    %345 = vsyncpa [#allocation4], 1
    %346 = vsyncpa [#allocation7], 1
    %347 = vsyncpa [#allocation5], 1

</llo_original>
